<compile_context>
chip_gen: v7x
topology: tpu7x:2x2x1
jax: 0.10.0
libtpu: 0.0.40
codegen_flags: <defaults>
</compile_context>

<pallas_src>
import functools

import jax
import jax.numpy as jnp
from jax.experimental import pallas as pl
from jax.experimental.pallas import tpu as pltpu

# TODO(synk): Act('leaky') source was not provided; assuming PyTorch default
# LeakyReLU negative_slope=0.01.
NEG_SLOPE = 0.01


def _leaky(x, neg_slope):
    # max(x, a*x) == LeakyReLU(x) for 0 <= a <= 1: one mul + one max (VPU).
    return jnp.maximum(x, neg_slope * x)


def _split_padding(padding_type):
    if isinstance(padding_type, (tuple, list)):
        pt_h, pt_w = padding_type
    else:
        pt_h = pt_w = padding_type
    return pt_h, pt_w


def _space_to_depth_2x(x):
    """(N, C, H, W) -> (N, 4*C, (H/2)*(W/2)); row order = (ph, pw, c).

    Same byte count as the raw input (1x) -- replaces the old 9x im2col.
    """
    n, c, h, w = x.shape
    x = x.reshape(n, c, h // 2, 2, w // 2, 2)          # (n, c, i, ph, j, pw)
    x = jnp.transpose(x, (0, 3, 5, 1, 2, 4))           # (n, ph, pw, c, i, j)
    return x.reshape(n, 4 * c, (h // 2) * (w // 2))


def _default_vmem_limit_bytes():
    # ~75% of physical VMEM (128 MiB on v5e/v6e -> 96 MiB, 64 MiB on v7x ->
    # 48 MiB), capped; safe 32 MiB fallback if the query is unavailable.
    try:
        cap = int(pltpu.get_tpu_info().vmem_capacity_bytes)
        return int(min(cap * 3 // 4, 100 * 1024 * 1024))
    except Exception:
        return 32 * 1024 * 1024


# ------------------------------ Pallas kernel ------------------------------ #

def _fused_comp_block_kernel(xq_ref, w1_ref, b1_ref, w2_ref, b2_ref, o_ref,
                             p1_ref, p2_ref, *, ho, wo, k, cin, cmid,
                             periodic_h, periodic_w, neg_slope, compute_dtype):
    """One batch element: LeakyReLU(conv2(LeakyReLU(conv1(x))))."""
    m = ho * wo
    pad = k // 2

    # ---- boundary machinery: hoisted & memoised, shared by both convs ----
    lane = jax.lax.broadcasted_iota(jnp.int32, (1, m), 1)
    w_idx = lane % wo
    h_idx = lane // wo
    keep_h_cache, cross_w_cache = {}, {}

    def keep_h(dh):      # lanes whose h-shifted source row is in range
        if dh not in keep_h_cache:
            keep_h_cache[dh] = (h_idx + dh >= 0) & (h_idx + dh < ho)
        return keep_h_cache[dh]

    def cross_w(dw):     # lanes whose w-shifted source column leaves the row
        if dw not in cross_w_cache:
            cross_w_cache[dw] = (w_idx + dw < 0) | (w_idx + dw >= wo)
        return cross_w_cache[dw]

    def shift_h(t, dh):
        """out[:, (i, j)] = t[:, (i + dh, j)] with the h boundary condition.

        jnp.roll(t, s)[p] = t[p - s]; a full-axis roll by a multiple of `wo`
        is exactly the periodic shift in h (w preserved) since m = ho * wo.
        """
        if dh == 0:
            return t
        t = jnp.roll(t, -wo * dh, axis=1)
        if not periodic_h:
            t = jnp.where(keep_h(dh), t, 0.0)
        return t

    def shift_w(t, dw):
        """out[:, (i, j)] = t[:, (i, j + dw)] with the w boundary condition."""
        if dw == 0:
            return t
        main = jnp.roll(t, -dw, axis=1)
        if periodic_w:
            wrap = jnp.roll(t, -dw + (wo if dw > 0 else -wo), axis=1)
            return jnp.where(cross_w(dw), wrap, main)
        return jnp.where(cross_w(dw), 0.0, main)

    # ---- conv1 (stride 2): taps from the space-to-depth block, one GEMM ----
    # xq rows are ordered (ph, pw, c); tap (kh, kw) needs original row
    # 2i + kh - pad = 2*(i + dh) + ph with (dh, ph) = divmod(kh - pad, 2),
    # i.e. a +/-1 shift on the half-resolution grid of phase (ph, pw).
    xq = xq_ref[0]                                        # (4*cin, m)
    phase = [xq[p * cin:(p + 1) * cin, :] for p in range(4)]

    hshift_cache = {}

    def phase_hshift(pidx, dh):                           # dedup rolls/masks
        if (pidx, dh) not in hshift_cache:
            hshift_cache[(pidx, dh)] = shift_h(phase[pidx], dh)
        return hshift_cache[(pidx, dh)]

    for kh in range(k):
        dh, ph = divmod(kh - pad, 2)
        for kw in range(k):
            dw, pw = divmod(kw - pad, 2)
            tap = shift_w(phase_hshift(ph * 2 + pw, dh), dw)
            r0 = (kh * k + kw) * cin
            p1_ref[r0:r0 + cin, :] = tap.astype(compute_dtype)

    h1 = jnp.dot(w1_ref[...], p1_ref[...],
                 preferred_element_type=jnp.float32)      # (cmid, m)
    h1 = _leaky(h1 + b1_ref[...], neg_slope)              # stays on-chip

    # ---- conv2 (stride 1): shifted taps of h1, one GEMM ----
    for kh in range(k):
        th = shift_h(h1, kh - pad)                        # hoisted over kw
        for kw in range(k):
            r0 = (kh * k + kw) * cmid
            p2_ref[r0:r0 + cmid, :] = shift_w(th, kw - pad).astype(compute_dtype)

    y = jnp.dot(w2_ref[...], p2_ref[...],
                preferred_element_type=jnp.float32)       # (cout, m)
    o_ref[0] = _leaky(y + b2_ref[...], neg_slope).astype(o_ref.dtype)


# ------------------------------ host wrapper -------------------------------- #

def aeflow_comp_block_forward(x_nchw, w1, b1, w2, b2, kernel_size, padding_type,
                              neg_slope=NEG_SLOPE, use_bf16_operands=False):
    n, cin, h, w = x_nchw.shape
    k = kernel_size
    assert k % 2 == 1, "odd kernel_size assumed (matches 'same'-style padding)"
    assert h % 2 == 0 and w % 2 == 0, "even H/W assumed for the stride-2 split"
    # TODO(synk): odd H/W would need a one-row/col halo in the phase split.

    cmid = w1.shape[0]
    cout = w2.shape[0]
    ho, wo = h // 2, w // 2
    m = ho * wo

    pt_h, pt_w = _split_padding(padding_type)

    # 1x-byte stride-2 phase split (replaces the old 9x im2col + host padding).
    xq = _space_to_depth_2x(x_nchw)                       # (n, 4*cin, m)

    # bf16 operands only pay off on v6e/v7x once channel counts grow; keep f32
    # at toy channel counts so the accuracy check stays tight.
    compute_dtype = jnp.bfloat16 if use_bf16_operands else x_nchw.dtype

    # Lane-dense 2-D weight tiles; K ordered (kh, kw, c) to match the stacks.
    w1m = jnp.transpose(w1, (0, 2, 3, 1)).reshape(cmid, k * k * cin).astype(compute_dtype)
    w2m = jnp.transpose(w2, (0, 2, 3, 1)).reshape(cout, k * k * cmid).astype(compute_dtype)
    b1c = b1.reshape(cmid, 1).astype(jnp.float32)
    b2c = b2.reshape(cout, 1).astype(jnp.float32)

    kernel = functools.partial(
        _fused_comp_block_kernel, ho=ho, wo=wo, k=k, cin=cin, cmid=cmid,
        periodic_h=(pt_h == "periodic"), periodic_w=(pt_w == "periodic"),
        neg_slope=neg_slope, compute_dtype=compute_dtype)

    out = pl.pallas_call(
        kernel,
        out_shape=jax.ShapeDtypeStruct((n, cout, m), x_nchw.dtype),
        grid_spec=pltpu.PrefetchScalarGridSpec(
            num_scalar_prefetch=0,
            grid=(n,),
            in_specs=[
                pl.BlockSpec((1, 4 * cin, m), lambda i: (i, 0, 0)),
                pl.BlockSpec((cmid, k * k * cin), lambda i: (0, 0)),
                pl.BlockSpec((cmid, 1), lambda i: (0, 0)),
                pl.BlockSpec((cout, k * k * cmid), lambda i: (0, 0)),
                pl.BlockSpec((cout, 1), lambda i: (0, 0)),
            ],
            out_specs=pl.BlockSpec((1, cout, m), lambda i: (i, 0, 0)),
            scratch_shapes=[
                pltpu.VMEM((k * k * cin, m), compute_dtype),   # conv1 tap stack
                pltpu.VMEM((k * k * cmid, m), compute_dtype),  # conv2 tap stack
            ],
        ),
        compiler_params=pltpu.CompilerParams(
            dimension_semantics=("parallel",),   # batch blocks -> megacore
            vmem_limit_bytes=_default_vmem_limit_bytes(),
        ),
    )(xq, w1m, b1c, w2m, b2c)

    # (N, C_out, Ho*Wo) lane-dense output -> NCHW with a reshape only.
    return out.reshape(n, cout, ho, wo)


# ------------------------------- module port -------------------------------- #

class AEflowV2CompBlockPallas:
    """JAX/Pallas port of AEflowV2CompBlock (transpose=False branch)."""

    def __init__(self, in_channels, out_channels, kernel_size, padding_type,
                 transpose=False, *, key):
        if transpose:
            # TODO(synk): ConvTranspose2dCustomBD source not provided; the
            # transpose=True branch is not implemented.
            raise NotImplementedError("transpose=True branch not implemented")
        self.in_channels = in_channels
        self.out_channels = out_channels
        self.kernel_size = kernel_size
        self.padding_type = padding_type

        k1, k2, k3, k4 = jax.random.split(key, 4)
        fan_in = in_channels * kernel_size * kernel_size
        scale = 1.0 / jnp.sqrt(jnp.float32(fan_in))
        # conv1: (Cin -> Cin, stride 2); conv2: (Cin -> Cout, stride 1).
        self.w1 = scale * jax.random.normal(
            k1, (in_channels, in_channels, kernel_size, kernel_size), jnp.float32)
        self.b1 = 0.01 * jax.random.normal(k2, (in_channels,), jnp.float32)
        self.w2 = scale * jax.random.normal(
            k3, (out_channels, in_channels, kernel_size, kernel_size), jnp.float32)
        self.b2 = 0.01 * jax.random.normal(k4, (out_channels,), jnp.float32)

    def __call__(self, x_nchw):
        return aeflow_comp_block_forward(
            x_nchw, self.w1, self.b1, self.w2, self.b2,
            self.kernel_size, self.padding_type)


# ------------------------- pure-JAX reference check ------------------------- #

def _pad_spatial_nchw(x, pad, pt_h, pt_w):
    # TODO(synk): Conv2dCustomBD source not provided; 'periodic' -> circular
    # wrap, any other boundary type -> zero padding (as in the validated v1).
    x = jnp.pad(x, ((0, 0), (0, 0), (pad, pad), (0, 0)),
                mode="wrap" if pt_h == "periodic" else "constant")
    x = jnp.pad(x, ((0, 0), (0, 0), (0, 0), (pad, pad)),
                mode="wrap" if pt_w == "periodic" else "constant")
    return x


def _reference_forward(x_nchw, w1, b1, w2, b2, kernel_size, padding_type,
                       neg_slope=NEG_SLOPE):
    pt_h, pt_w = _split_padding(padding_type)

    def conv_bd(x, wgt, bias, stride):
        xp = _pad_spatial_nchw(x, kernel_size // 2, pt_h, pt_w)
        y = jax.lax.conv_general_dilated(
            xp, wgt, window_strides=(stride, stride), padding="VALID",
            dimension_numbers=("NCHW", "OIHW", "NCHW"),
            precision=jax.lax.Precision.HIGHEST)
        return _leaky(y + bias[None, :, None, None], neg_slope)

    return conv_bd(conv_bd(x_nchw, w1, b1, 2), w2, b2, 1)


# ----------------------------------- main ------------------------------------ #

if __name__ == "__main__":
    key = jax.random.PRNGKey(0)
    k_x, k_p = jax.random.split(key)

    # Small shapes consistent with the module: NCHW = (2, 4, 16, 16)
    in_channels, out_channels, kernel_size = 4, 8, 3
    x = jax.random.normal(k_x, (2, in_channels, 16, 16), jnp.float32)

    for padding_type in ("periodic", "zeros", ("periodic", "zeros")):
        block = AEflowV2CompBlockPallas(
            in_channels, out_channels, kernel_size,
            padding_type=padding_type, transpose=False, key=k_p)

        y = jax.block_until_ready(block(x))

        # conv1 stride 2: 16 -> 8 spatial; conv2 stride 1 keeps 8; channels -> 8.
        assert y.shape == (2, out_channels, 8, 8), y.shape
        assert bool(jnp.all(jnp.isfinite(y)))

        y_ref = _reference_forward(x, block.w1, block.b1, block.w2, block.b2,
                                   kernel_size, padding_type)
        err = float(jnp.max(jnp.abs(y - y_ref)))
        assert bool(jnp.allclose(y, y_ref, rtol=1e-2, atol=1e-2)), (padding_type, err)

    print("KERNEL_OK")
</pallas_src>

<mosaic_0001>
module attributes {stable_mosaic.version = 11 : i64} {
  func.func @_fused_comp_block_kernel(%arg0: i32, %arg1: memref<1x16x64xf32, #tpu.memory_space<vmem>>, %arg2: memref<4x36xf32, #tpu.memory_space<vmem>>, %arg3: memref<4x1xf32, #tpu.memory_space<vmem>>, %arg4: memref<8x36xf32, #tpu.memory_space<vmem>>, %arg5: memref<8x1xf32, #tpu.memory_space<vmem>>, %arg6: memref<1x8x64xf32, #tpu.memory_space<vmem>>, %arg7: memref<36x64xf32, #tpu.memory_space<vmem>>, %arg8: memref<36x64xf32, #tpu.memory_space<vmem>>) attributes {dimension_semantics = [#tpu.dimension_semantics<parallel>], iteration_bounds = array<i64: 2>, scalar_prefetch = 0 : i64, scratch_operands = 2 : i64, tpu.core_type = #tpu.core_type<tc>, window_params = [{transform_indices = @transform_0, window_bounds = array<i64: 1, 16, 64>}, {pipeline_mode = #tpu.pipeline_mode<synchronous>, transform_indices = @transform_1, window_bounds = array<i64: 4, 36>}, {pipeline_mode = #tpu.pipeline_mode<synchronous>, transform_indices = @transform_2, window_bounds = array<i64: 4, 1>}, {pipeline_mode = #tpu.pipeline_mode<synchronous>, transform_indices = @transform_3, window_bounds = array<i64: 8, 36>}, {pipeline_mode = #tpu.pipeline_mode<synchronous>, transform_indices = @transform_4, window_bounds = array<i64: 8, 1>}, {transform_indices = @transform_5, window_bounds = array<i64: 1, 8, 64>}]} {
    %0 = tpu.iota {dimensions = array<i32: 1>} : vector<1x64xi32>
    %c8_i32 = arith.constant 8 : i32
    %c0_i32 = arith.constant 0 : i32
    %1 = arith.cmpi eq, %c8_i32, %c0_i32 : i32
    %c1_i32 = arith.constant 1 : i32
    %2 = arith.select %1, %c1_i32, %c8_i32 : i32
    %3 = vector.broadcast %2 : i32 to vector<1x64xi32>
    %4 = arith.remsi %0, %3 : vector<1x64xi32>
    %c0_i32_0 = arith.constant 0 : i32
    %5 = vector.broadcast %c0_i32_0 : i32 to vector<1x64xi32>
    %6 = arith.cmpi ne, %4, %5 : vector<1x64xi32>
    %c0_i32_1 = arith.constant 0 : i32
    %7 = vector.broadcast %c0_i32_1 : i32 to vector<1x64xi32>
    %8 = arith.cmpi slt, %4, %7 : vector<1x64xi32>
    %c0_i32_2 = arith.constant 0 : i32
    %9 = arith.cmpi slt, %2, %c0_i32_2 : i32
    %10 = vector.broadcast %9 : i1 to vector<1x64xi1>
    %11 = vector.broadcast %10 : vector<1x64xi1> to vector<1x64xi1>
    %12 = arith.xori %8, %11 : vector<1x64xi1>
    %13 = arith.andi %12, %6 : vector<1x64xi1>
    %14 = vector.broadcast %2 : i32 to vector<1x64xi32>
    %15 = arith.addi %4, %14 : vector<1x64xi32>
    %16 = arith.select %13, %15, %4 : vector<1x64xi1>, vector<1x64xi32>
    %c0 = arith.constant 0 : index
    %c0_3 = arith.constant 0 : index
    %c0_4 = arith.constant 0 : index
    %17 = vector.load %arg1[%c0, %c0_3, %c0_4] : memref<1x16x64xf32, #tpu.memory_space<vmem>>, vector<1x16x64xf32>
    %18 = vector.shape_cast %17 : vector<1x16x64xf32> to vector<16x64xf32>
    %19 = vector.extract_strided_slice %18 {offsets = [0, 0], sizes = [4, 64], strides = [1, 1]} : vector<16x64xf32> to vector<4x64xf32>
    %20 = vector.extract_strided_slice %18 {offsets = [4, 0], sizes = [4, 64], strides = [1, 1]} : vector<16x64xf32> to vector<4x64xf32>
    %21 = vector.extract_strided_slice %18 {offsets = [8, 0], sizes = [4, 64], strides = [1, 1]} : vector<16x64xf32> to vector<4x64xf32>
    %22 = vector.extract_strided_slice %18 {offsets = [12, 0], sizes = [4, 64], strides = [1, 1]} : vector<16x64xf32> to vector<4x64xf32>
    %23 = vector.extract_strided_slice %22 {offsets = [0, 56], sizes = [4, 8], strides = [1, 1]} : vector<4x64xf32> to vector<4x8xf32>
    %24 = vector.extract_strided_slice %22 {offsets = [0, 0], sizes = [4, 56], strides = [1, 1]} : vector<4x64xf32> to vector<4x56xf32>
    %25 = tpu.concatenate %23, %24 in 1 : vector<4x8xf32>, vector<4x56xf32> -> vector<4x64xf32>
    %26 = vector.extract_strided_slice %25 {offsets = [0, 63], sizes = [4, 1], strides = [1, 1]} : vector<4x64xf32> to vector<4x1xf32>
    %27 = vector.extract_strided_slice %25 {offsets = [0, 0], sizes = [4, 63], strides = [1, 1]} : vector<4x64xf32> to vector<4x63xf32>
    %28 = tpu.concatenate %26, %27 in 1 : vector<4x1xf32>, vector<4x63xf32> -> vector<4x64xf32>
    %29 = vector.extract_strided_slice %25 {offsets = [0, 7], sizes = [4, 57], strides = [1, 1]} : vector<4x64xf32> to vector<4x57xf32>
    %30 = vector.extract_strided_slice %25 {offsets = [0, 0], sizes = [4, 7], strides = [1, 1]} : vector<4x64xf32> to vector<4x7xf32>
    %31 = tpu.concatenate %29, %30 in 1 : vector<4x57xf32>, vector<4x7xf32> -> vector<4x64xf32>
    %c-1_i32 = arith.constant -1 : i32
    %32 = vector.broadcast %c-1_i32 : i32 to vector<1x64xi32>
    %33 = arith.addi %16, %32 : vector<1x64xi32>
    %c0_i32_5 = arith.constant 0 : i32
    %34 = vector.broadcast %c0_i32_5 : i32 to vector<1x64xi32>
    %35 = arith.cmpi slt, %33, %34 : vector<1x64xi32>
    %c-1_i32_6 = arith.constant -1 : i32
    %36 = vector.broadcast %c-1_i32_6 : i32 to vector<1x64xi32>
    %37 = arith.addi %16, %36 : vector<1x64xi32>
    %c8_i32_7 = arith.constant 8 : i32
    %38 = vector.broadcast %c8_i32_7 : i32 to vector<1x64xi32>
    %39 = arith.cmpi sge, %37, %38 : vector<1x64xi32>
    %40 = arith.ori %35, %39 : vector<1x64xi1>
    %41 = vector.shape_cast %40 : vector<1x64xi1> to vector<1x64xi1>
    %42 = vector.broadcast %41 : vector<1x64xi1> to vector<4x64xi1>
    %43 = arith.select %42, %31, %28 : vector<4x64xi1>, vector<4x64xf32>
    %c0_8 = arith.constant 0 : index
    %c0_9 = arith.constant 0 : index
    %44 = vector.load %arg7[%c0_8, %c0_9] : memref<36x64xf32, #tpu.memory_space<vmem>>, vector<4x64xf32>
    tpu.vector_store %arg7[%c0_8, %c0_9], %43 {strides = array<i32>} : memref<36x64xf32, #tpu.memory_space<vmem>>, vector<4x64xf32>,
    %45 = vector.extract_strided_slice %21 {offsets = [0, 56], sizes = [4, 8], strides = [1, 1]} : vector<4x64xf32> to vector<4x8xf32>
    %46 = vector.extract_strided_slice %21 {offsets = [0, 0], sizes = [4, 56], strides = [1, 1]} : vector<4x64xf32> to vector<4x56xf32>
    %47 = tpu.concatenate %45, %46 in 1 : vector<4x8xf32>, vector<4x56xf32> -> vector<4x64xf32>
    %c4 = arith.constant 4 : index
    %c0_10 = arith.constant 0 : index
    %48 = vector.load %arg7[%c4, %c0_10] : memref<36x64xf32, #tpu.memory_space<vmem>>, vector<4x64xf32>
    tpu.vector_store %arg7[%c4, %c0_10], %47 {strides = array<i32>} : memref<36x64xf32, #tpu.memory_space<vmem>>, vector<4x64xf32>,
    %c8 = arith.constant 8 : index
    %c0_11 = arith.constant 0 : index
    %49 = vector.load %arg7[%c8, %c0_11] : memref<36x64xf32, #tpu.memory_space<vmem>>, vector<4x64xf32>
    tpu.vector_store %arg7[%c8, %c0_11], %25 {strides = array<i32>} : memref<36x64xf32, #tpu.memory_space<vmem>>, vector<4x64xf32>,
    %50 = vector.extract_strided_slice %20 {offsets = [0, 63], sizes = [4, 1], strides = [1, 1]} : vector<4x64xf32> to vector<4x1xf32>
    %51 = vector.extract_strided_slice %20 {offsets = [0, 0], sizes = [4, 63], strides = [1, 1]} : vector<4x64xf32> to vector<4x63xf32>
    %52 = tpu.concatenate %50, %51 in 1 : vector<4x1xf32>, vector<4x63xf32> -> vector<4x64xf32>
    %53 = vector.extract_strided_slice %20 {offsets = [0, 7], sizes = [4, 57], strides = [1, 1]} : vector<4x64xf32> to vector<4x57xf32>
    %54 = vector.extract_strided_slice %20 {offsets = [0, 0], sizes = [4, 7], strides = [1, 1]} : vector<4x64xf32> to vector<4x7xf32>
    %55 = tpu.concatenate %53, %54 in 1 : vector<4x57xf32>, vector<4x7xf32> -> vector<4x64xf32>
    %56 = vector.shape_cast %40 : vector<1x64xi1> to vector<1x64xi1>
    %57 = vector.broadcast %56 : vector<1x64xi1> to vector<4x64xi1>
    %58 = arith.select %57, %55, %52 : vector<4x64xi1>, vector<4x64xf32>
    %c12 = arith.constant 12 : index
    %c0_12 = arith.constant 0 : index
    %59 = vector.load %arg7[%c12, %c0_12] : memref<36x64xf32, #tpu.memory_space<vmem>>, vector<4x64xf32>
    tpu.vector_store %arg7[%c12, %c0_12], %58 {strides = array<i32>} : memref<36x64xf32, #tpu.memory_space<vmem>>, vector<4x64xf32>,
    %c16 = arith.constant 16 : index
    %c0_13 = arith.constant 0 : index
    %60 = vector.load %arg7[%c16, %c0_13] : memref<36x64xf32, #tpu.memory_space<vmem>>, vector<4x64xf32>
    tpu.vector_store %arg7[%c16, %c0_13], %19 {strides = array<i32>} : memref<36x64xf32, #tpu.memory_space<vmem>>, vector<4x64xf32>,
    %c20 = arith.constant 20 : index
    %c0_14 = arith.constant 0 : index
    %61 = vector.load %arg7[%c20, %c0_14] : memref<36x64xf32, #tpu.memory_space<vmem>>, vector<4x64xf32>
    tpu.vector_store %arg7[%c20, %c0_14], %20 {strides = array<i32>} : memref<36x64xf32, #tpu.memory_space<vmem>>, vector<4x64xf32>,
    %62 = vector.extract_strided_slice %22 {offsets = [0, 63], sizes = [4, 1], strides = [1, 1]} : vector<4x64xf32> to vector<4x1xf32>
    %63 = vector.extract_strided_slice %22 {offsets = [0, 0], sizes = [4, 63], strides = [1, 1]} : vector<4x64xf32> to vector<4x63xf32>
    %64 = tpu.concatenate %62, %63 in 1 : vector<4x1xf32>, vector<4x63xf32> -> vector<4x64xf32>
    %65 = vector.extract_strided_slice %22 {offsets = [0, 7], sizes = [4, 57], strides = [1, 1]} : vector<4x64xf32> to vector<4x57xf32>
    %66 = vector.extract_strided_slice %22 {offsets = [0, 0], sizes = [4, 7], strides = [1, 1]} : vector<4x64xf32> to vector<4x7xf32>
    %67 = tpu.concatenate %65, %66 in 1 : vector<4x57xf32>, vector<4x7xf32> -> vector<4x64xf32>
    %68 = vector.shape_cast %40 : vector<1x64xi1> to vector<1x64xi1>
    %69 = vector.broadcast %68 : vector<1x64xi1> to vector<4x64xi1>
    %70 = arith.select %69, %67, %64 : vector<4x64xi1>, vector<4x64xf32>
    %c24 = arith.constant 24 : index
    %c0_15 = arith.constant 0 : index
    %71 = vector.load %arg7[%c24, %c0_15] : memref<36x64xf32, #tpu.memory_space<vmem>>, vector<4x64xf32>
    tpu.vector_store %arg7[%c24, %c0_15], %70 {strides = array<i32>} : memref<36x64xf32, #tpu.memory_space<vmem>>, vector<4x64xf32>,
    %c28 = arith.constant 28 : index
    %c0_16 = arith.constant 0 : index
    %72 = vector.load %arg7[%c28, %c0_16] : memref<36x64xf32, #tpu.memory_space<vmem>>, vector<4x64xf32>
    tpu.vector_store %arg7[%c28, %c0_16], %21 {strides = array<i32>} : memref<36x64xf32, #tpu.memory_space<vmem>>, vector<4x64xf32>,
    %c32 = arith.constant 32 : index
    %c0_17 = arith.constant 0 : index
    %73 = vector.load %arg7[%c32, %c0_17] : memref<36x64xf32, #tpu.memory_space<vmem>>, vector<4x64xf32>
    tpu.vector_store %arg7[%c32, %c0_17], %22 {strides = array<i32>} : memref<36x64xf32, #tpu.memory_space<vmem>>, vector<4x64xf32>,
    %c0_18 = arith.constant 0 : index
    %c0_19 = arith.constant 0 : index
    %74 = vector.load %arg2[%c0_18, %c0_19] : memref<4x36xf32, #tpu.memory_space<vmem>>, vector<4x36xf32>
    %c0_20 = arith.constant 0 : index
    %c0_21 = arith.constant 0 : index
    %75 = vector.load %arg7[%c0_20, %c0_21] : memref<36x64xf32, #tpu.memory_space<vmem>>, vector<36x64xf32>
    %cst = arith.constant dense<0.000000e+00> : vector<4x64xf32>
    %76 = tpu.matmul %74, %75, %cst {dimension_numbers = #tpu.dot_dimension_numbers<[1], [0], [0], [1], [0, 0, 1, 1], [], []>} : vector<4x36xf32>, vector<36x64xf32>, vector<4x64xf32> -> vector<4x64xf32>
    %c0_22 = arith.constant 0 : index
    %c0_23 = arith.constant 0 : index
    %77 = vector.load %arg3[%c0_22, %c0_23] : memref<4x1xf32, #tpu.memory_space<vmem>>, vector<4x1xf32>
    %78 = vector.broadcast %77 : vector<4x1xf32> to vector<4x64xf32>
    %79 = arith.addf %76, %78 : vector<4x64xf32>
    %cst_24 = arith.constant 0.00999999977 : f32
    %80 = vector.broadcast %cst_24 : f32 to vector<4x64xf32>
    %81 = arith.mulf %80, %79 : vector<4x64xf32>
    %82 = arith.maximumf %79, %81 : vector<4x64xf32>
    %83 = vector.extract_strided_slice %82 {offsets = [0, 56], sizes = [4, 8], strides = [1, 1]} : vector<4x64xf32> to vector<4x8xf32>
    %84 = vector.extract_strided_slice %82 {offsets = [0, 0], sizes = [4, 56], strides = [1, 1]} : vector<4x64xf32> to vector<4x56xf32>
    %85 = tpu.concatenate %83, %84 in 1 : vector<4x8xf32>, vector<4x56xf32> -> vector<4x64xf32>
    %86 = vector.extract_strided_slice %85 {offsets = [0, 63], sizes = [4, 1], strides = [1, 1]} : vector<4x64xf32> to vector<4x1xf32>
    %87 = vector.extract_strided_slice %85 {offsets = [0, 0], sizes = [4, 63], strides = [1, 1]} : vector<4x64xf32> to vector<4x63xf32>
    %88 = tpu.concatenate %86, %87 in 1 : vector<4x1xf32>, vector<4x63xf32> -> vector<4x64xf32>
    %89 = vector.extract_strided_slice %85 {offsets = [0, 7], sizes = [4, 57], strides = [1, 1]} : vector<4x64xf32> to vector<4x57xf32>
    %90 = vector.extract_strided_slice %85 {offsets = [0, 0], sizes = [4, 7], strides = [1, 1]} : vector<4x64xf32> to vector<4x7xf32>
    %91 = tpu.concatenate %89, %90 in 1 : vector<4x57xf32>, vector<4x7xf32> -> vector<4x64xf32>
    %92 = vector.shape_cast %40 : vector<1x64xi1> to vector<1x64xi1>
    %93 = vector.broadcast %92 : vector<1x64xi1> to vector<4x64xi1>
    %94 = arith.select %93, %91, %88 : vector<4x64xi1>, vector<4x64xf32>
    %c0_25 = arith.constant 0 : index
    %c0_26 = arith.constant 0 : index
    %95 = vector.load %arg8[%c0_25, %c0_26] : memref<36x64xf32, #tpu.memory_space<vmem>>, vector<4x64xf32>
    tpu.vector_store %arg8[%c0_25, %c0_26], %94 {strides = array<i32>} : memref<36x64xf32, #tpu.memory_space<vmem>>, vector<4x64xf32>,
    %c4_27 = arith.constant 4 : index
    %c0_28 = arith.constant 0 : index
    %96 = vector.load %arg8[%c4_27, %c0_28] : memref<36x64xf32, #tpu.memory_space<vmem>>, vector<4x64xf32>
    tpu.vector_store %arg8[%c4_27, %c0_28], %85 {strides = array<i32>} : memref<36x64xf32, #tpu.memory_space<vmem>>, vector<4x64xf32>,
    %97 = vector.extract_strided_slice %85 {offsets = [0, 1], sizes = [4, 63], strides = [1, 1]} : vector<4x64xf32> to vector<4x63xf32>
    %98 = vector.extract_strided_slice %85 {offsets = [0, 0], sizes = [4, 1], strides = [1, 1]} : vector<4x64xf32> to vector<4x1xf32>
    %99 = tpu.concatenate %97, %98 in 1 : vector<4x63xf32>, vector<4x1xf32> -> vector<4x64xf32>
    %100 = vector.extract_strided_slice %85 {offsets = [0, 57], sizes = [4, 7], strides = [1, 1]} : vector<4x64xf32> to vector<4x7xf32>
    %101 = vector.extract_strided_slice %85 {offsets = [0, 0], sizes = [4, 57], strides = [1, 1]} : vector<4x64xf32> to vector<4x57xf32>
    %102 = tpu.concatenate %100, %101 in 1 : vector<4x7xf32>, vector<4x57xf32> -> vector<4x64xf32>
    %c1_i32_29 = arith.constant 1 : i32
    %103 = vector.broadcast %c1_i32_29 : i32 to vector<1x64xi32>
    %104 = arith.addi %16, %103 : vector<1x64xi32>
    %c0_i32_30 = arith.constant 0 : i32
    %105 = vector.broadcast %c0_i32_30 : i32 to vector<1x64xi32>
    %106 = arith.cmpi slt, %104, %105 : vector<1x64xi32>
    %c1_i32_31 = arith.constant 1 : i32
    %107 = vector.broadcast %c1_i32_31 : i32 to vector<1x64xi32>
    %108 = arith.addi %16, %107 : vector<1x64xi32>
    %c8_i32_32 = arith.constant 8 : i32
    %109 = vector.broadcast %c8_i32_32 : i32 to vector<1x64xi32>
    %110 = arith.cmpi sge, %108, %109 : vector<1x64xi32>
    %111 = arith.ori %106, %110 : vector<1x64xi1>
    %112 = vector.shape_cast %111 : vector<1x64xi1> to vector<1x64xi1>
    %113 = vector.broadcast %112 : vector<1x64xi1> to vector<4x64xi1>
    %114 = arith.select %113, %102, %99 : vector<4x64xi1>, vector<4x64xf32>
    %c8_33 = arith.constant 8 : index
    %c0_34 = arith.constant 0 : index
    %115 = vector.load %arg8[%c8_33, %c0_34] : memref<36x64xf32, #tpu.memory_space<vmem>>, vector<4x64xf32>
    tpu.vector_store %arg8[%c8_33, %c0_34], %114 {strides = array<i32>} : memref<36x64xf32, #tpu.memory_space<vmem>>, vector<4x64xf32>,
    %116 = vector.extract_strided_slice %82 {offsets = [0, 63], sizes = [4, 1], strides = [1, 1]} : vector<4x64xf32> to vector<4x1xf32>
    %117 = vector.extract_strided_slice %82 {offsets = [0, 0], sizes = [4, 63], strides = [1, 1]} : vector<4x64xf32> to vector<4x63xf32>
    %118 = tpu.concatenate %116, %117 in 1 : vector<4x1xf32>, vector<4x63xf32> -> vector<4x64xf32>
    %119 = vector.extract_strided_slice %82 {offsets = [0, 7], sizes = [4, 57], strides = [1, 1]} : vector<4x64xf32> to vector<4x57xf32>
    %120 = vector.extract_strided_slice %82 {offsets = [0, 0], sizes = [4, 7], strides = [1, 1]} : vector<4x64xf32> to vector<4x7xf32>
    %121 = tpu.concatenate %119, %120 in 1 : vector<4x57xf32>, vector<4x7xf32> -> vector<4x64xf32>
    %122 = vector.shape_cast %40 : vector<1x64xi1> to vector<1x64xi1>
    %123 = vector.broadcast %122 : vector<1x64xi1> to vector<4x64xi1>
    %124 = arith.select %123, %121, %118 : vector<4x64xi1>, vector<4x64xf32>
    %c12_35 = arith.constant 12 : index
    %c0_36 = arith.constant 0 : index
    %125 = vector.load %arg8[%c12_35, %c0_36] : memref<36x64xf32, #tpu.memory_space<vmem>>, vector<4x64xf32>
    tpu.vector_store %arg8[%c12_35, %c0_36], %124 {strides = array<i32>} : memref<36x64xf32, #tpu.memory_space<vmem>>, vector<4x64xf32>,
    %c16_37 = arith.constant 16 : index
    %c0_38 = arith.constant 0 : index
    %126 = vector.load %arg8[%c16_37, %c0_38] : memref<36x64xf32, #tpu.memory_space<vmem>>, vector<4x64xf32>
    tpu.vector_store %arg8[%c16_37, %c0_38], %82 {strides = array<i32>} : memref<36x64xf32, #tpu.memory_space<vmem>>, vector<4x64xf32>,
    %127 = vector.extract_strided_slice %82 {offsets = [0, 1], sizes = [4, 63], strides = [1, 1]} : vector<4x64xf32> to vector<4x63xf32>
    %128 = vector.extract_strided_slice %82 {offsets = [0, 0], sizes = [4, 1], strides = [1, 1]} : vector<4x64xf32> to vector<4x1xf32>
    %129 = tpu.concatenate %127, %128 in 1 : vector<4x63xf32>, vector<4x1xf32> -> vector<4x64xf32>
    %130 = vector.extract_strided_slice %82 {offsets = [0, 57], sizes = [4, 7], strides = [1, 1]} : vector<4x64xf32> to vector<4x7xf32>
    %131 = vector.extract_strided_slice %82 {offsets = [0, 0], sizes = [4, 57], strides = [1, 1]} : vector<4x64xf32> to vector<4x57xf32>
    %132 = tpu.concatenate %130, %131 in 1 : vector<4x7xf32>, vector<4x57xf32> -> vector<4x64xf32>
    %133 = vector.shape_cast %111 : vector<1x64xi1> to vector<1x64xi1>
    %134 = vector.broadcast %133 : vector<1x64xi1> to vector<4x64xi1>
    %135 = arith.select %134, %132, %129 : vector<4x64xi1>, vector<4x64xf32>
    %c20_39 = arith.constant 20 : index
    %c0_40 = arith.constant 0 : index
    %136 = vector.load %arg8[%c20_39, %c0_40] : memref<36x64xf32, #tpu.memory_space<vmem>>, vector<4x64xf32>
    tpu.vector_store %arg8[%c20_39, %c0_40], %135 {strides = array<i32>} : memref<36x64xf32, #tpu.memory_space<vmem>>, vector<4x64xf32>,
    %137 = vector.extract_strided_slice %82 {offsets = [0, 8], sizes = [4, 56], strides = [1, 1]} : vector<4x64xf32> to vector<4x56xf32>
    %138 = vector.extract_strided_slice %82 {offsets = [0, 0], sizes = [4, 8], strides = [1, 1]} : vector<4x64xf32> to vector<4x8xf32>
    %139 = tpu.concatenate %137, %138 in 1 : vector<4x56xf32>, vector<4x8xf32> -> vector<4x64xf32>
    %140 = vector.extract_strided_slice %139 {offsets = [0, 63], sizes = [4, 1], strides = [1, 1]} : vector<4x64xf32> to vector<4x1xf32>
    %141 = vector.extract_strided_slice %139 {offsets = [0, 0], sizes = [4, 63], strides = [1, 1]} : vector<4x64xf32> to vector<4x63xf32>
    %142 = tpu.concatenate %140, %141 in 1 : vector<4x1xf32>, vector<4x63xf32> -> vector<4x64xf32>
    %143 = vector.extract_strided_slice %139 {offsets = [0, 7], sizes = [4, 57], strides = [1, 1]} : vector<4x64xf32> to vector<4x57xf32>
    %144 = vector.extract_strided_slice %139 {offsets = [0, 0], sizes = [4, 7], strides = [1, 1]} : vector<4x64xf32> to vector<4x7xf32>
    %145 = tpu.concatenate %143, %144 in 1 : vector<4x57xf32>, vector<4x7xf32> -> vector<4x64xf32>
    %146 = vector.shape_cast %40 : vector<1x64xi1> to vector<1x64xi1>
    %147 = vector.broadcast %146 : vector<1x64xi1> to vector<4x64xi1>
    %148 = arith.select %147, %145, %142 : vector<4x64xi1>, vector<4x64xf32>
    %c24_41 = arith.constant 24 : index
    %c0_42 = arith.constant 0 : index
    %149 = vector.load %arg8[%c24_41, %c0_42] : memref<36x64xf32, #tpu.memory_space<vmem>>, vector<4x64xf32>
    tpu.vector_store %arg8[%c24_41, %c0_42], %148 {strides = array<i32>} : memref<36x64xf32, #tpu.memory_space<vmem>>, vector<4x64xf32>,
    %c28_43 = arith.constant 28 : index
    %c0_44 = arith.constant 0 : index
    %150 = vector.load %arg8[%c28_43, %c0_44] : memref<36x64xf32, #tpu.memory_space<vmem>>, vector<4x64xf32>
    tpu.vector_store %arg8[%c28_43, %c0_44], %139 {strides = array<i32>} : memref<36x64xf32, #tpu.memory_space<vmem>>, vector<4x64xf32>,
    %151 = vector.extract_strided_slice %139 {offsets = [0, 1], sizes = [4, 63], strides = [1, 1]} : vector<4x64xf32> to vector<4x63xf32>
    %152 = vector.extract_strided_slice %139 {offsets = [0, 0], sizes = [4, 1], strides = [1, 1]} : vector<4x64xf32> to vector<4x1xf32>
    %153 = tpu.concatenate %151, %152 in 1 : vector<4x63xf32>, vector<4x1xf32> -> vector<4x64xf32>
    %154 = vector.extract_strided_slice %139 {offsets = [0, 57], sizes = [4, 7], strides = [1, 1]} : vector<4x64xf32> to vector<4x7xf32>
    %155 = vector.extract_strided_slice %139 {offsets = [0, 0], sizes = [4, 57], strides = [1, 1]} : vector<4x64xf32> to vector<4x57xf32>
    %156 = tpu.concatenate %154, %155 in 1 : vector<4x7xf32>, vector<4x57xf32> -> vector<4x64xf32>
    %157 = vector.shape_cast %111 : vector<1x64xi1> to vector<1x64xi1>
    %158 = vector.broadcast %157 : vector<1x64xi1> to vector<4x64xi1>
    %159 = arith.select %158, %156, %153 : vector<4x64xi1>, vector<4x64xf32>
    %c32_45 = arith.constant 32 : index
    %c0_46 = arith.constant 0 : index
    %160 = vector.load %arg8[%c32_45, %c0_46] : memref<36x64xf32, #tpu.memory_space<vmem>>, vector<4x64xf32>
    tpu.vector_store %arg8[%c32_45, %c0_46], %159 {strides = array<i32>} : memref<36x64xf32, #tpu.memory_space<vmem>>, vector<4x64xf32>,
    %c0_47 = arith.constant 0 : index
    %c0_48 = arith.constant 0 : index
    %161 = vector.load %arg4[%c0_47, %c0_48] : memref<8x36xf32, #tpu.memory_space<vmem>>, vector<8x36xf32>
    %c0_49 = arith.constant 0 : index
    %c0_50 = arith.constant 0 : index
    %162 = vector.load %arg8[%c0_49, %c0_50] : memref<36x64xf32, #tpu.memory_space<vmem>>, vector<36x64xf32>
    %cst_51 = arith.constant dense<0.000000e+00> : vector<8x64xf32>
    %163 = tpu.matmul %161, %162, %cst_51 {dimension_numbers = #tpu.dot_dimension_numbers<[1], [0], [0], [1], [0, 0, 1, 1], [], []>} : vector<8x36xf32>, vector<36x64xf32>, vector<8x64xf32> -> vector<8x64xf32>
    %c0_52 = arith.constant 0 : index
    %c0_53 = arith.constant 0 : index
    %164 = vector.load %arg5[%c0_52, %c0_53] : memref<8x1xf32, #tpu.memory_space<vmem>>, vector<8x1xf32>
    %165 = vector.broadcast %164 : vector<8x1xf32> to vector<8x64xf32>
    %166 = arith.addf %163, %165 : vector<8x64xf32>
    %cst_54 = arith.constant 0.00999999977 : f32
    %167 = vector.broadcast %cst_54 : f32 to vector<8x64xf32>
    %168 = arith.mulf %167, %166 : vector<8x64xf32>
    %169 = arith.maximumf %166, %168 : vector<8x64xf32>
    %c0_55 = arith.constant 0 : index
    %c0_56 = arith.constant 0 : index
    %c0_57 = arith.constant 0 : index
    %170 = vector.load %arg6[%c0_55, %c0_56, %c0_57] : memref<1x8x64xf32, #tpu.memory_space<vmem>>, vector<1x8x64xf32>
    %171 = vector.shape_cast %170 : vector<1x8x64xf32> to vector<8x64xf32>
    %172 = vector.shape_cast %169 : vector<8x64xf32> to vector<1x8x64xf32>
    tpu.vector_store %arg6[%c0_55, %c0_56, %c0_57], %172 {strides = array<i32>} : memref<1x8x64xf32, #tpu.memory_space<vmem>>, vector<1x8x64xf32>,
    return
  }
  func.func @transform_0(%arg0: i32) -> (i32, i32, i32) {
    %c0_i32 = arith.constant 0 : i32
    %c0_i32_0 = arith.constant 0 : i32
    %c0_i32_1 = arith.constant 0 : i32
    return %arg0, %c0_i32, %c0_i32_0 : i32, i32, i32
  }
  func.func @transform_1(%arg0: i32) -> (i32, i32) {
    %c0_i32 = arith.constant 0 : i32
    %c0_i32_0 = arith.constant 0 : i32
    %c0_i32_1 = arith.constant 0 : i32
    return %c0_i32, %c0_i32_0 : i32, i32
  }
  func.func @transform_2(%arg0: i32) -> (i32, i32) {
    %c0_i32 = arith.constant 0 : i32
    %c0_i32_0 = arith.constant 0 : i32
    %c0_i32_1 = arith.constant 0 : i32
    return %c0_i32, %c0_i32_0 : i32, i32
  }
  func.func @transform_3(%arg0: i32) -> (i32, i32) {
    %c0_i32 = arith.constant 0 : i32
    %c0_i32_0 = arith.constant 0 : i32
    %c0_i32_1 = arith.constant 0 : i32
    return %c0_i32, %c0_i32_0 : i32, i32
  }
  func.func @transform_4(%arg0: i32) -> (i32, i32) {
    %c0_i32 = arith.constant 0 : i32
    %c0_i32_0 = arith.constant 0 : i32
    %c0_i32_1 = arith.constant 0 : i32
    return %c0_i32, %c0_i32_0 : i32, i32
  }
  func.func @transform_5(%arg0: i32) -> (i32, i32, i32) {
    %c0_i32 = arith.constant 0 : i32
    %c0_i32_0 = arith.constant 0 : i32
    %c0_i32_1 = arith.constant 0 : i32
    return %arg0, %c0_i32, %c0_i32_0 : i32, i32, i32
  }
}

</mosaic_0001>

<llo_original>
// kernel: tpu_custom_call.1
$region0: #{tpu_custom_call.1}
  #allocation0 [shape = 'u32[]', space=smem, size = 0x4, offset = 0x4, fixed_abs, tag = 'smem constant byte address 0x4 - core index']
  #allocation1 [shape = 'u32[144,128]{1,0:T(1,128)}', space=vmem, size = 0x12000, scoped, tag = 'internal scratch']
  #allocation2 [shape = 'f32[36,64]{1,0:T(8,128)}', space=vmem, size = 0x5000, scoped, tag = 'scratch operand']
  #allocation3 [shape = 'f32[36,64]{1,0:T(8,128)}', space=vmem, size = 0x5000, scoped, tag = 'scratch operand']
  %s0 = inlined_call_operand.hbm [shape: f32[2,16,64], index: 0, kind: input, shape index: {}]
  %s1 = inlined_call_operand.vmem [shape: f32[4,36], index: 1, kind: input, shape index: {}]
  %s2 = inlined_call_operand.vmem [shape: f32[4,1], index: 2, kind: input, shape index: {}]
  %s3 = inlined_call_operand.vmem [shape: f32[8,36], index: 3, kind: input, shape index: {}]
  %s4 = inlined_call_operand.vmem [shape: f32[8,1], index: 4, kind: input, shape index: {}]
  %s5 = inlined_call_operand.hbm [shape: f32[2,8,64], index: 5, kind: output, shape index: {}]
  %s6 = sld [smem:[#allocation0]]
  $region57: #{tpu_custom_call.1} parent=0
    _
  %s8 = ssub.s32 1, %s6
  %s9 = scalar_select 0, %s8, %s6
  $region1: #{tpu_custom_call.1} parent=0
    #allocation4 [shape = 'u8[16384]{0}', space=vmem, size = 0x4000, scoped, tag = 'input window, operand 0']
    #allocation5 [shape = 's32[2]{0}', space=sflag, size = 0x8, scoped, tag = 'scoped memory for tpu_custom_call.1']
    #allocation6 [shape = 's32[2]{0}', space=sflag, size = 0x8, scoped, tag = 'scoped memory for tpu_custom_call.1']
    #allocation7 [shape = 'u8[8192]{0}', space=vmem, size = 0x2000, scoped, tag = 'output window, operand 0']
    %10 = vsyncpa [#allocation5], 0
    %s11 = scalar_lea.sflag [#allocation5], 1
    %12 = vsyncpa %s11, 0
    %13 = vsyncpa [#allocation6], 0
    %s14 = scalar_lea.sflag [#allocation6], 1
    %15 = vsyncpa %s14, 0
    loop: start=0, step=1, limit=4
    $region2: #{tpu_custom_call.1} parent=1 // loop_pre_header
      _
    $region3: #{tpu_custom_call.1} parent=1 // loop_header
      %s17 = sphi 0, %s21
      %p18 = scmp.ge.s32.totalorder %s17, 4
      %s27 = sphi 0, %s29
      %s30 = sphi 0, %s27
      %s31 = sphi 0, %s30
      %s47 = sphi 0, %s31
      %s51 = sphi 0, %s51
      %s53 = sphi 0, %s51
      %s54 = sphi 0, %s53
      %s68 = sphi 0, %s54
      %s72 = sphi 0, %s72
      %s74 = sphi 0, %s72
      %s75 = sphi 0, %s74
      %s89 = sphi 0, %s75
      %s93 = sphi 0, %s93
      %s95 = sphi 0, %s93
      %s96 = sphi 0, %s95
      %s110 = sphi 0, %s96
      %s114 = sphi 0, %s114
      %s116 = sphi 0, %s114
      %s117 = sphi 0, %s116
      %s131 = sphi 0, %s117
      %s137 = sphi 0, %s139
      %s140 = sphi 0, %s137
      %s141 = sphi 0, %s140
      %s157 = sphi 0, %s141
    $region4: #{tpu_custom_call.1} parent=1 // loop_header_branch
      %20 = sbr.rel (%p18) target = $region8
    $region5: #{tpu_custom_call.1} parent=1 // loop_body
      %s22 = ssub.s32 %s17, 1
      %s23 = ssub.s32 %s17, 2
      %s24 = sadd.s32 %s17, 1
      %s25 = ssub.s32 %s17, %s24
      %p26 = scmp.eq.s32.totalorder %s25, 0
      %s28 = sadd.s32 %s27, 1
      %s29 = scalar_select %p26, %s27, %s28
      %p32 = pneg %p26
      %p33 = scmp.eq.s32.totalorder %s17, 1
      %p34 = por %p32, %p33
      %p35 = scmp.ne.s32.totalorder %s27, %s30
      %p36 = scmp.eq.s32.totalorder %s17, 0
      %p37 = por %p35, %p36
      %p38 = scmp.ne.s32.totalorder %s27, %s30
      %p39 = scmp.eq.s32.totalorder %s22, 1
      %p40 = por %p38, %p39
      %p41 = scmp.ne.s32.totalorder %s30, %s31
      %p42 = scmp.eq.s32.totalorder %s22, 0
      %p43 = por %p41, %p42
      %p44 = scmp.ne.s32.totalorder %s30, %s31
      %p45 = scmp.eq.s32.totalorder %s23, 1
      %p46 = por %p44, %p45
      %p48 = scmp.ne.s32.totalorder %s31, %s47
      %p49 = scmp.eq.s32.totalorder %s23, 0
      %p50 = por %p48, %p49
      %s52 = sadd.s32 %s51, 1
      %p55 = scmp.eq.s32.totalorder %s17, 1
      %p56 = scmp.ne.s32.totalorder %s51, %s53
      %p57 = scmp.eq.s32.totalorder %s17, 0
      %p58 = por %p56, %p57
      %p59 = scmp.ne.s32.totalorder %s51, %s53
      %p60 = scmp.eq.s32.totalorder %s22, 1
      %p61 = por %p59, %p60
      %p62 = scmp.ne.s32.totalorder %s53, %s54
      %p63 = scmp.eq.s32.totalorder %s22, 0
      %p64 = por %p62, %p63
      %p65 = scmp.ne.s32.totalorder %s53, %s54
      %p66 = scmp.eq.s32.totalorder %s23, 1
      %p67 = por %p65, %p66
      %p69 = scmp.ne.s32.totalorder %s54, %s68
      %p70 = scmp.eq.s32.totalorder %s23, 0
      %p71 = por %p69, %p70
      %s73 = sadd.s32 %s72, 1
      %p76 = scmp.eq.s32.totalorder %s17, 1
      %p77 = scmp.ne.s32.totalorder %s72, %s74
      %p78 = scmp.eq.s32.totalorder %s17, 0
      %p79 = por %p77, %p78
      %p80 = scmp.ne.s32.totalorder %s72, %s74
      %p81 = scmp.eq.s32.totalorder %s22, 1
      %p82 = por %p80, %p81
      %p83 = scmp.ne.s32.totalorder %s74, %s75
      %p84 = scmp.eq.s32.totalorder %s22, 0
      %p85 = por %p83, %p84
      %p86 = scmp.ne.s32.totalorder %s74, %s75
      %p87 = scmp.eq.s32.totalorder %s23, 1
      %p88 = por %p86, %p87
      %p90 = scmp.ne.s32.totalorder %s75, %s89
      %p91 = scmp.eq.s32.totalorder %s23, 0
      %p92 = por %p90, %p91
      %s94 = sadd.s32 %s93, 1
      %p97 = scmp.eq.s32.totalorder %s17, 1
      %p98 = scmp.ne.s32.totalorder %s93, %s95
      %p99 = scmp.eq.s32.totalorder %s17, 0
      %p100 = por %p98, %p99
      %p101 = scmp.ne.s32.totalorder %s93, %s95
      %p102 = scmp.eq.s32.totalorder %s22, 1
      %p103 = por %p101, %p102
      %p104 = scmp.ne.s32.totalorder %s95, %s96
      %p105 = scmp.eq.s32.totalorder %s22, 0
      %p106 = por %p104, %p105
      %p107 = scmp.ne.s32.totalorder %s95, %s96
      %p108 = scmp.eq.s32.totalorder %s23, 1
      %p109 = por %p107, %p108
      %p111 = scmp.ne.s32.totalorder %s96, %s110
      %p112 = scmp.eq.s32.totalorder %s23, 0
      %p113 = por %p111, %p112
      %s115 = sadd.s32 %s114, 1
      %p118 = scmp.eq.s32.totalorder %s17, 1
      %p119 = scmp.ne.s32.totalorder %s114, %s116
      %p120 = scmp.eq.s32.totalorder %s17, 0
      %p121 = por %p119, %p120
      %p122 = scmp.ne.s32.totalorder %s114, %s116
      %p123 = scmp.eq.s32.totalorder %s22, 1
      %p124 = por %p122, %p123
      %p125 = scmp.ne.s32.totalorder %s116, %s117
      %p126 = scmp.eq.s32.totalorder %s22, 0
      %p127 = por %p125, %p126
      %p128 = scmp.ne.s32.totalorder %s116, %s117
      %p129 = scmp.eq.s32.totalorder %s23, 1
      %p130 = por %p128, %p129
      %p132 = scmp.ne.s32.totalorder %s117, %s131
      %p133 = scmp.eq.s32.totalorder %s23, 0
      %p134 = por %p132, %p133
      %s135 = ssub.s32 %s17, %s24
      %p136 = scmp.eq.s32.totalorder %s135, 0
      %s138 = sadd.s32 %s137, 1
      %s139 = scalar_select %p136, %s137, %s138
      %p142 = pneg %p136
      %p143 = scmp.eq.s32.totalorder %s17, 1
      %p144 = por %p142, %p143
      %p145 = scmp.ne.s32.totalorder %s137, %s140
      %p146 = scmp.eq.s32.totalorder %s17, 0
      %p147 = por %p145, %p146
      %p148 = scmp.ne.s32.totalorder %s137, %s140
      %p149 = scmp.eq.s32.totalorder %s22, 1
      %p150 = por %p148, %p149
      %p151 = scmp.ne.s32.totalorder %s140, %s141
      %p152 = scmp.eq.s32.totalorder %s22, 0
      %p153 = por %p151, %p152
      %p154 = scmp.ne.s32.totalorder %s140, %s141
      %p155 = scmp.eq.s32.totalorder %s23, 1
      %p156 = por %p154, %p155
      %p158 = scmp.ne.s32.totalorder %s141, %s157
      %p159 = scmp.eq.s32.totalorder %s23, 0
      %p160 = por %p158, %p159
      %p161 = scmp.le.s32.totalorder 1, %s17
      %p162 = scmp.lt.s32.totalorder %s17, 3
      %p163 = pnand %p161, %p162
      %p164 = pneg %p163
      // Predicated region
      $region9: #{tpu_custom_call.1} parent=5 // pred_check
        _
      $region10: #{tpu_custom_call.1} parent=5 // pred_check_branch
        %166 = sbr.rel (%p163) target = $region12
      $region11: #{tpu_custom_call.1} parent=5 // pred_region
        %s167 = ssub.s32 %s17, 1
        // Predicated region
        $region13: #{tpu_custom_call.1} parent=11 // pred_check
          %p168 = pneg %p64
        $region14: #{tpu_custom_call.1} parent=11 // pred_check_branch
          %170 = sbr.rel (%p168) target = $region16
        $region15: #{tpu_custom_call.1} parent=11 // pred_region
          _
        $region16: #{tpu_custom_call.1} parent=11 // pred_fallthru
          _
        // Predicated region
        $region17: #{tpu_custom_call.1} parent=11 // pred_check
          %p171 = pneg %p85
        $region18: #{tpu_custom_call.1} parent=11 // pred_check_branch
          %173 = sbr.rel (%p171) target = $region20
        $region19: #{tpu_custom_call.1} parent=11 // pred_region
          _
        $region20: #{tpu_custom_call.1} parent=11 // pred_fallthru
          _
        // Predicated region
        $region21: #{tpu_custom_call.1} parent=11 // pred_check
          %p174 = pneg %p106
        $region22: #{tpu_custom_call.1} parent=11 // pred_check_branch
          %176 = sbr.rel (%p174) target = $region24
        $region23: #{tpu_custom_call.1} parent=11 // pred_region
          _
        $region24: #{tpu_custom_call.1} parent=11 // pred_fallthru
          _
        // Predicated region
        $region25: #{tpu_custom_call.1} parent=11 // pred_check
          %p177 = pneg %p127
        $region26: #{tpu_custom_call.1} parent=11 // pred_check_branch
          %179 = sbr.rel (%p177) target = $region28
        $region27: #{tpu_custom_call.1} parent=11 // pred_region
          _
        $region28: #{tpu_custom_call.1} parent=11 // pred_fallthru
          _
      $region12: #{tpu_custom_call.1} parent=5 // pred_fallthru
        _
      %p180 = scmp.lt.s32.totalorder %s17, 2
      // Predicated region
      $region29: #{tpu_custom_call.1} parent=5 // pred_check
        %p181 = pneg %p180
      $region30: #{tpu_custom_call.1} parent=5 // pred_check_branch
        %183 = sbr.rel (%p181) target = $region32
      $region31: #{tpu_custom_call.1} parent=5 // pred_region
        // Predicated region
        $region33: #{tpu_custom_call.1} parent=31 // pred_check
          %p184 = pneg %p37
        $region34: #{tpu_custom_call.1} parent=31 // pred_check_branch
          %186 = sbr.rel (%p184) target = $region36
        $region35: #{tpu_custom_call.1} parent=31 // pred_region
          %s187 = sand.u32 %s27, 1
          %s188 = scalar_lea.sflag [#allocation5], %s187
          %s189 = sand.u32 %s27, 1
          %s190 = smul.addr %s189, 16
          %s191 = scalar_lea.vmem [#allocation4], %s190
          %s193 = ssub.s32 256, 256
          %194 = vsyncadd %s188, %s193
          %s195 = smul.addr %s17, 2
          %s196 = smul.addr %s195, 128
          %s197 = scalar_lea.hbm %s0, %s196
          %s198 = sshll.u32 %s191, 4
          %s199 = int_to_ptr.vmem [resolvable:$true] %s198
          %204 = dma.hbm_to_vmem [thread:$0]  %s197, 256, %s199, %s188, 128, 128, 8
        $region36: #{tpu_custom_call.1} parent=31 // pred_fallthru
          _
      $region32: #{tpu_custom_call.1} parent=5 // pred_fallthru
        _
      %p205 = scmp.le.s32.totalorder 1, %s17
      %p206 = scmp.lt.s32.totalorder %s17, 3
      %p207 = pnand %p205, %p206
      %p208 = pneg %p207
      // Predicated region
      $region37: #{tpu_custom_call.1} parent=5 // pred_check
        _
      $region38: #{tpu_custom_call.1} parent=5 // pred_check_branch
        %210 = sbr.rel (%p207) target = $region40
      $region39: #{tpu_custom_call.1} parent=5 // pred_region
        %s211 = ssub.s32 %s17, 1
        %s212 = sand.u32 %s30, 1
        %s213 = scalar_lea.sflag [#allocation5], %s212
        %s214 = sand.u32 %s30, 1
        %s215 = smul.addr %s214, 16
        %s216 = scalar_lea.vmem [#allocation4], %s215
        // Predicated region
        $region41: #{tpu_custom_call.1} parent=39 // pred_check
          %p217 = pneg %p43
        $region42: #{tpu_custom_call.1} parent=39 // pred_check_branch
          %219 = sbr.rel (%p217) target = $region44
        $region43: #{tpu_custom_call.1} parent=39 // pred_region
          %220 = dma.done %s213, 256
        $region44: #{tpu_custom_call.1} parent=39 // pred_fallthru
          _
        %s221 = sand.u32 %s30, 1
        %s222 = scalar_lea.sflag [#allocation5], %s221
        %s223 = sand.u32 %s30, 1
        %s224 = smul.addr %s223, 16
        %s225 = scalar_lea.vmem [#allocation4], %s224
        %p226 = pneg %p43
        %p227 = pneg %p40
        %p228 = pneg %p64
        %p229 = pneg %p61
        %p230 = pneg %p85
        %p231 = pneg %p82
        %p232 = pneg %p106
        %p233 = pneg %p103
        %p234 = pneg %p127
        %p235 = pneg %p124
        %p236 = pneg %p153
        %p237 = pneg %p150
        %s238 = sand.u32 %s140, 1
        %s239 = scalar_lea.sflag [#allocation6], %s238
        %s240 = sand.u32 %s140, 1
        %s241 = smul.addr %s240, 8
        %s242 = scalar_lea.vmem [#allocation7], %s241
        %v243 = vlaneseq
        %v244 = vand.u32 %v243, 127
        %vm245 = vcmp.lt.s32.totalorder %v244, 0
        %v246 = vsub.s32 0, %v244
        %v247 = vsel %vm245, %v246, %v244
        %v248 = vshrl.u32 %v247, 3
        %v249 = vand.u32 %v247, 7
        %v250 = vsub.s32 0, %v249
        %v251 = vsel %vm245, %v250, %v249
        %vm252 = vcmp.ne.s32.totalorder %v251, 0
        %vm253 = vcmp.lt.s32.totalorder %v251, 0
        %vm254 = vmand %vm253, %vm252
        %v255 = vadd.s32 %v251, 8
        %v256 = vsel %vm254, %v255, %v251
        %v257 = vld [vmem:[%s216] sm:$0xff]
        %v258 = vld [vmem:[%s216 + $0x8] sm:$0xff]
        %260 = vrot.lane.b32.xlu0 %v258, 72
        %v261 = vpop.permute.xlu0 %260
        %263 = vrot.lane.b32.xlu0 %v258, 8
        %v264 = vpop.permute.xlu0 %263
        %vm266 = vcmask 64512
        %v267 = vsel %vm266, %v261, %v264
        %269 = vrot.lane.b32.xlu0 %v267, 65
        %v270 = vpop.permute.xlu0 %269
        %272 = vrot.lane.b32.xlu0 %v267, 1
        %v273 = vpop.permute.xlu0 %272
        %vm275 = vcmask 7168
        %v276 = vsel %vm275, %v270, %v273
        %277 = vrot.lane.b32.xlu0 %v267, 121
        %v278 = vpop.permute.xlu0 %277
        %280 = vrot.lane.b32.xlu0 %v267, 57
        %v281 = vpop.permute.xlu0 %280
        %vm283 = vcmask 465920
        %v284 = vsel %vm283, %v278, %v281
        %v285 = vadd.s32 %v256, 4294967295
        %vm286 = vcmp.lt.s32.totalorder %v285, 0
        %vm287 = vcmp.ge.s32.totalorder %v285, 8
        %vm288 = vmor %vm286, %vm287
        %v289 = vsel %vm288, 1, 0
        %vm290 = vcmp.eq.s32.totalorder %v289, 1
        %v291 = vsel %vm290, %v284, %v276
        %vm292 = vcmask 523268
        %293 = vst.msk [vmem:[#allocation2 - $0x4] sm:$0xf0] %vm292, %v291
        %vm294 = vcmask 519168
        %295 = vst.msk [vmem:[#allocation2 + $0x4] sm:$0xf] %vm294, %v267
        %296 = vst.msk [vmem:[#allocation2 + $0x4] sm:$0xf0] %vm292, %v267
        %298 = vrot.lane.b32.xlu0 %v257, 65
        %v299 = vpop.permute.xlu0 %298
        %301 = vrot.lane.b32.xlu0 %v257, 1
        %v302 = vpop.permute.xlu0 %301
        %v304 = vsel %vm275, %v299, %v302
        %305 = vrot.lane.b32.xlu0 %v257, 121
        %v306 = vpop.permute.xlu0 %305
        %308 = vrot.lane.b32.xlu0 %v257, 57
        %v309 = vpop.permute.xlu0 %308
        %v311 = vsel %vm283, %v306, %v309
        %v312 = vsel %vm290, %v311, %v304
        %313 = vst.msk [vmem:[#allocation2 + $0x8] sm:$0xf0] %vm292, %v312
        %314 = vst.msk [vmem:[#allocation2 + $0x10] sm:$0xf] %vm294, %v257
        %315 = vst.msk [vmem:[#allocation2 + $0x10] sm:$0xf0] %vm292, %v257
        %316 = vrot.lane.b32.xlu0 %v258, 65
        %v317 = vpop.permute.xlu0 %316
        %319 = vrot.lane.b32.xlu0 %v258, 1
        %v320 = vpop.permute.xlu0 %319
        %v322 = vsel %vm275, %v317, %v320
        %323 = vrot.lane.b32.xlu0 %v258, 121
        %v324 = vpop.permute.xlu0 %323
        %326 = vrot.lane.b32.xlu0 %v258, 57
        %v327 = vpop.permute.xlu0 %326
        %v329 = vsel %vm283, %v324, %v327
        %v330 = vsel %vm290, %v329, %v322
        %331 = vst.msk [vmem:[#allocation2 + $0x14] sm:$0xf0] %vm292, %v330
        %332 = vst.msk [vmem:[#allocation2 + $0x1c] sm:$0xf] %vm294, %v258
        %333 = vst.msk [vmem:[#allocation2 + $0x1c] sm:$0xf0] %vm292, %v258
        %v334 = vld [vmem:[%s1] sm:$0xf]
        %v335 = vld [vmem:[#allocation2] sm:$0xff]
        %v336 = vld [vmem:[#allocation2 + $0x8] sm:$0xff]
        %v337 = vld [vmem:[#allocation2 + $0x10] sm:$0xff]
        %v338 = vld [vmem:[#allocation2 + $0x18] sm:$0xff]
        %v339 = vld [vmem:[#allocation2 + $0x20] sm:$0xf]
        %v340 = vld [vmem:[%s2] sm:$0xf]
        %342 = vset.pattern.permute.xlu0 0
        %343 = vperm.xlu0 %342, %v340
        %v344 = vpop.permute.xlu0 %343
        %vm346 = vcmask 293888
        %v348 = vsel %vm346, %v334, 0
        %vm350 = vcmask 1043456
        %v352 = vsel %vm350, %v339, 0
        %354 = vmatprep.subr.mxu0 0.0
        %355 = vmatpush1.msra.mxu0 %v335
        %356 = vmatprep.subr.mxu0 0.0
        %357 = vmatpush1.msra.mxu0 %v336
        %358 = vmatprep.subr.mxu0 0.0
        %359 = vmatpush1.msra.mxu0 %v337
        %360 = vmatprep.subr.mxu0 0.0
        %361 = vmatpush1.msra.mxu0 %v338
        %362 = vmatprep.subr.mxu0 0.0
        %363 = vmatpush1.msra.mxu0 %v352
        %364 = vmatprep.subr.mxu0 0.0
        %365 = vmatpush1.msra.mxu0 0.0
        %366 = vmatprep.subr.mxu0 0.0
        %367 = vmatpush1.msra.mxu0 0.0
        %368 = vmatprep.subr.mxu0 0.0
        %369 = vmatpush1.msra.mxu0 0.0
        %370 = vmatprep.subr.mxu0 0.0
        %371 = vmatpush1.msra.mxu0 0.0
        %372 = vmatprep.subr.mxu0 0.0
        %373 = vmatpush1.msra.mxu0 0.0
        %374 = vmatprep.subr.mxu0 0.0
        %375 = vmatpush1.msra.mxu0 0.0
        %376 = vmatprep.subr.mxu0 0.0
        %377 = vmatpush1.msra.mxu0 0.0
        %378 = vmatprep.subr.mxu0 0.0
        %379 = vmatpush1.msra.mxu0 0.0
        %380 = vmatprep.subr.mxu0 0.0
        %381 = vmatpush1.msra.mxu0 0.0
        %382 = vmatprep.subr.mxu0 0.0
        %383 = vmatpush1.msra.mxu0 0.0
        %384 = vmatprep.subr.mxu0 0.0
        %385 = vmatpush1.msra.mxu0 0.0
        %386 = vmatprep.subr.mxu0 0.0
        %387 = vmatpush1.msra.mxu0 0.0
        %388 = vmatprep.subr.mxu0 0.0
        %389 = vmatpush1.msra.mxu0 0.0
        %390 = vmatprep.subr.mxu0 0.0
        %391 = vmatpush1.msra.mxu0 0.0
        %392 = vmatprep.subr.mxu0 0.0
        %393 = vmatpush1.msra.mxu0 0.0
        %394 = vmatprep.subr.mxu0 0.0
        %395 = vmatpush1.msra.mxu0 0.0
        %396 = vmatprep.subr.mxu0 0.0
        %397 = vmatpush1.msra.mxu0 0.0
        %398 = vmatprep.subr.mxu0 0.0
        %399 = vmatpush1.msra.mxu0 0.0
        %400 = vmatprep.subr.mxu0 0.0
        %401 = vmatpush1.msra.mxu0 0.0
        %402 = vmatprep.subr.mxu0 0.0
        %403 = vmatpush1.msra.mxu0 0.0
        %404 = vmatprep.subr.mxu0 0.0
        %405 = vmatpush1.msra.mxu0 0.0
        %406 = vmatprep.subr.mxu0 0.0
        %407 = vmatpush1.msra.mxu0 0.0
        %408 = vmatprep.subr.mxu0 0.0
        %409 = vmatpush1.msra.mxu0 0.0
        %410 = vmatprep.subr.mxu0 0.0
        %411 = vmatpush1.msra.mxu0 0.0
        %412 = vmatprep.subr.mxu0 0.0
        %413 = vmatpush1.msra.mxu0 0.0
        %414 = vmatprep.subr.mxu0 0.0
        %415 = vmatpush1.msra.mxu0 0.0
        %416 = vmatprep.subr.mxu0 0.0
        %417 = vmatpush1.msra.mxu0 0.0
        %418 = vmatprep.mubr.f32.mxu0 0.0
        %419 = vmatmul.mubr.f32.gmra.mrb[0].mxu0 %v348
        %v420 = vpop.f32.mrb[0].mxu0
        %v421 = vadd.f32 %v344, %v420
        %v422 = vpop.f32.mrb[0].mxu0
        %423 = vdwg.mxu0
        %v424 = vmul.f32 %v421, 0.01
        %v425 = vmax.f32 %v421, %v424
        %427 = vrot.lane.b32.xlu0 %v425, 72
        %v428 = vpop.permute.xlu0 %427
        %430 = vrot.lane.b32.xlu0 %v425, 8
        %v431 = vpop.permute.xlu0 %430
        %v433 = vsel %vm266, %v428, %v431
        %435 = vrot.lane.b32.xlu0 %v433, 65
        %v436 = vpop.permute.xlu0 %435
        %438 = vrot.lane.b32.xlu0 %v433, 1
        %v439 = vpop.permute.xlu0 %438
        %v441 = vsel %vm275, %v436, %v439
        %442 = vrot.lane.b32.xlu0 %v433, 121
        %v443 = vpop.permute.xlu0 %442
        %445 = vrot.lane.b32.xlu0 %v433, 57
        %v446 = vpop.permute.xlu0 %445
        %v448 = vsel %vm283, %v443, %v446
        %v449 = vsel %vm290, %v448, %v441
        %450 = vst.msk [vmem:[#allocation3] sm:$0xf] %vm294, %v449
        %451 = vst.msk [vmem:[#allocation3 + $0x4] sm:$0xf] %vm294, %v433
        %452 = vrot.lane.b32.xlu0 %v433, 127
        %v453 = vpop.permute.xlu0 %452
        %455 = vrot.lane.b32.xlu0 %v433, 63
        %v456 = vpop.permute.xlu0 %455
        %vm458 = vcmask 515072
        %v459 = vsel %vm458, %v453, %v456
        %460 = vrot.lane.b32.xlu0 %v433, 71
        %v461 = vpop.permute.xlu0 %460
        %463 = vrot.lane.b32.xlu0 %v433, 7
        %v464 = vpop.permute.xlu0 %463
        %vm466 = vcmask 56320
        %v467 = vsel %vm466, %v461, %v464
        %v468 = vadd.s32 %v256, 1
        %vm469 = vcmp.lt.s32.totalorder %v468, 0
        %vm470 = vcmp.ge.s32.totalorder %v468, 8
        %vm471 = vmor %vm469, %vm470
        %v472 = vsel %vm471, 1, 0
        %vm473 = vcmp.eq.s32.totalorder %v472, 1
        %v474 = vsel %vm473, %v467, %v459
        %475 = vst.msk [vmem:[#allocation3 + $0x8] sm:$0xf] %vm294, %v474
        %476 = vrot.lane.b32.xlu0 %v425, 65
        %v477 = vpop.permute.xlu0 %476
        %479 = vrot.lane.b32.xlu0 %v425, 1
        %v480 = vpop.permute.xlu0 %479
        %v482 = vsel %vm275, %v477, %v480
        %483 = vrot.lane.b32.xlu0 %v425, 121
        %v484 = vpop.permute.xlu0 %483
        %486 = vrot.lane.b32.xlu0 %v425, 57
        %v487 = vpop.permute.xlu0 %486
        %v489 = vsel %vm283, %v484, %v487
        %v490 = vsel %vm290, %v489, %v482
        %491 = vst.msk [vmem:[#allocation3 + $0xc] sm:$0xf] %vm294, %v490
        %492 = vst.msk [vmem:[#allocation3 + $0x10] sm:$0xf] %vm294, %v425
        %493 = vrot.lane.b32.xlu0 %v425, 127
        %v494 = vpop.permute.xlu0 %493
        %496 = vrot.lane.b32.xlu0 %v425, 63
        %v497 = vpop.permute.xlu0 %496
        %v499 = vsel %vm458, %v494, %v497
        %500 = vrot.lane.b32.xlu0 %v425, 71
        %v501 = vpop.permute.xlu0 %500
        %503 = vrot.lane.b32.xlu0 %v425, 7
        %v504 = vpop.permute.xlu0 %503
        %v506 = vsel %vm466, %v501, %v504
        %v507 = vsel %vm473, %v506, %v499
        %508 = vst.msk [vmem:[#allocation3 + $0x14] sm:$0xf] %vm294, %v507
        %509 = vrot.lane.b32.xlu0 %v425, 120
        %v510 = vpop.permute.xlu0 %509
        %512 = vrot.lane.b32.xlu0 %v425, 56
        %v513 = vpop.permute.xlu0 %512
        %vm515 = vcmask 457728
        %v516 = vsel %vm515, %v510, %v513
        %518 = vrot.lane.b32.xlu0 %v516, 65
        %v519 = vpop.permute.xlu0 %518
        %521 = vrot.lane.b32.xlu0 %v516, 1
        %v522 = vpop.permute.xlu0 %521
        %v524 = vsel %vm275, %v519, %v522
        %525 = vrot.lane.b32.xlu0 %v516, 121
        %v526 = vpop.permute.xlu0 %525
        %528 = vrot.lane.b32.xlu0 %v516, 57
        %v529 = vpop.permute.xlu0 %528
        %v531 = vsel %vm283, %v526, %v529
        %v532 = vsel %vm290, %v531, %v524
        %533 = vst.msk [vmem:[#allocation3 + $0x18] sm:$0xf] %vm294, %v532
        %534 = vst.msk [vmem:[#allocation3 + $0x1c] sm:$0xf] %vm294, %v516
        %535 = vrot.lane.b32.xlu0 %v516, 127
        %v536 = vpop.permute.xlu0 %535
        %538 = vrot.lane.b32.xlu0 %v516, 63
        %v539 = vpop.permute.xlu0 %538
        %v541 = vsel %vm458, %v536, %v539
        %542 = vrot.lane.b32.xlu0 %v516, 71
        %v543 = vpop.permute.xlu0 %542
        %545 = vrot.lane.b32.xlu0 %v516, 7
        %v546 = vpop.permute.xlu0 %545
        %v548 = vsel %vm466, %v543, %v546
        %v549 = vsel %vm473, %v548, %v541
        %550 = vst.msk [vmem:[#allocation3 + $0x20] sm:$0xf] %vm294, %v549
        %v551 = vld [vmem:[%s3] sm:$0xff]
        %v552 = vld [vmem:[#allocation3] sm:$0xff]
        %v553 = vld [vmem:[#allocation3 + $0x8] sm:$0xff]
        %v554 = vld [vmem:[#allocation3 + $0x10] sm:$0xff]
        %v555 = vld [vmem:[#allocation3 + $0x18] sm:$0xff]
        %v556 = vld [vmem:[#allocation3 + $0x20] sm:$0xf]
        %v557 = vld [vmem:[%s4] sm:$0xff]
        %559 = vset.pattern.permute.xlu0 0
        %560 = vperm.xlu0 %559, %v557
        %v561 = vpop.permute.xlu0 %560
        %v564 = vsel %vm346, %v551, 0
        %v567 = vsel %vm350, %v556, 0
        %569 = vmatprep.subr.mxu0 0.0
        %570 = vmatpush1.msra.mxu0 %v552
        %571 = vmatprep.subr.mxu0 0.0
        %572 = vmatpush1.msra.mxu0 %v553
        %573 = vmatprep.subr.mxu0 0.0
        %574 = vmatpush1.msra.mxu0 %v554
        %575 = vmatprep.subr.mxu0 0.0
        %576 = vmatpush1.msra.mxu0 %v555
        %577 = vmatprep.subr.mxu0 0.0
        %578 = vmatpush1.msra.mxu0 %v567
        %579 = vmatprep.subr.mxu0 0.0
        %580 = vmatpush1.msra.mxu0 0.0
        %581 = vmatprep.subr.mxu0 0.0
        %582 = vmatpush1.msra.mxu0 0.0
        %583 = vmatprep.subr.mxu0 0.0
        %584 = vmatpush1.msra.mxu0 0.0
        %585 = vmatprep.subr.mxu0 0.0
        %586 = vmatpush1.msra.mxu0 0.0
        %587 = vmatprep.subr.mxu0 0.0
        %588 = vmatpush1.msra.mxu0 0.0
        %589 = vmatprep.subr.mxu0 0.0
        %590 = vmatpush1.msra.mxu0 0.0
        %591 = vmatprep.subr.mxu0 0.0
        %592 = vmatpush1.msra.mxu0 0.0
        %593 = vmatprep.subr.mxu0 0.0
        %594 = vmatpush1.msra.mxu0 0.0
        %595 = vmatprep.subr.mxu0 0.0
        %596 = vmatpush1.msra.mxu0 0.0
        %597 = vmatprep.subr.mxu0 0.0
        %598 = vmatpush1.msra.mxu0 0.0
        %599 = vmatprep.subr.mxu0 0.0
        %600 = vmatpush1.msra.mxu0 0.0
        %601 = vmatprep.subr.mxu0 0.0
        %602 = vmatpush1.msra.mxu0 0.0
        %603 = vmatprep.subr.mxu0 0.0
        %604 = vmatpush1.msra.mxu0 0.0
        %605 = vmatprep.subr.mxu0 0.0
        %606 = vmatpush1.msra.mxu0 0.0
        %607 = vmatprep.subr.mxu0 0.0
        %608 = vmatpush1.msra.mxu0 0.0
        %609 = vmatprep.subr.mxu0 0.0
        %610 = vmatpush1.msra.mxu0 0.0
        %611 = vmatprep.subr.mxu0 0.0
        %612 = vmatpush1.msra.mxu0 0.0
        %613 = vmatprep.subr.mxu0 0.0
        %614 = vmatpush1.msra.mxu0 0.0
        %615 = vmatprep.subr.mxu0 0.0
        %616 = vmatpush1.msra.mxu0 0.0
        %617 = vmatprep.subr.mxu0 0.0
        %618 = vmatpush1.msra.mxu0 0.0
        %619 = vmatprep.subr.mxu0 0.0
        %620 = vmatpush1.msra.mxu0 0.0
        %621 = vmatprep.subr.mxu0 0.0
        %622 = vmatpush1.msra.mxu0 0.0
        %623 = vmatprep.subr.mxu0 0.0
        %624 = vmatpush1.msra.mxu0 0.0
        %625 = vmatprep.subr.mxu0 0.0
        %626 = vmatpush1.msra.mxu0 0.0
        %627 = vmatprep.subr.mxu0 0.0
        %628 = vmatpush1.msra.mxu0 0.0
        %629 = vmatprep.subr.mxu0 0.0
        %630 = vmatpush1.msra.mxu0 0.0
        %631 = vmatprep.subr.mxu0 0.0
        %632 = vmatpush1.msra.mxu0 0.0
        %633 = vmatprep.mubr.f32.mxu0 0.0
        %634 = vmatmul.mubr.f32.gmra.mrb[0].mxu0 %v564
        %v635 = vpop.f32.mrb[0].mxu0
        %v636 = vadd.f32 %v561, %v635
        %v637 = vpop.f32.mrb[0].mxu0
        %638 = vdwg.mxu0
        %v639 = vmul.f32 %v636, 0.01
        %v640 = vmax.f32 %v636, %v639
        %vm641 = vcmask 523264
        %642 = vst.msk [vmem:[%s242] sm:$0xff] %vm641, %v640
        %s643 = sand.u32 %s140, 1
        %s644 = scalar_lea.sflag [#allocation6], %s643
        %s645 = sand.u32 %s140, 1
        %s646 = smul.addr %s645, 8
        %s647 = scalar_lea.vmem [#allocation7], %s646
        // Predicated region
        $region45: #{tpu_custom_call.1} parent=39 // pred_check
          %p648 = pneg %p150
        $region46: #{tpu_custom_call.1} parent=39 // pred_check_branch
          %650 = sbr.rel (%p648) target = $region48
        $region47: #{tpu_custom_call.1} parent=39 // pred_region
          %s652 = ssub.s32 128, 128
          %653 = vsyncadd %s644, %s652
          %s654 = smul.addr %s22, 128
          %s655 = scalar_lea.hbm %s5, %s654
          %s657 = sshll.u32 %s647, 4
          %s658 = int_to_ptr.vmem [resolvable:$true] %s657
          %660 = dma.vmem_to_hbm [thread:$0]  %s658, 128, %s655, %s644
        $region48: #{tpu_custom_call.1} parent=39 // pred_fallthru
          _
      $region40: #{tpu_custom_call.1} parent=5 // pred_fallthru
        _
      %p661 = scmp.le.s32.totalorder 2, %s17
      // Predicated region
      $region49: #{tpu_custom_call.1} parent=5 // pred_check
        %p662 = pneg %p661
      $region50: #{tpu_custom_call.1} parent=5 // pred_check_branch
        %664 = sbr.rel (%p662) target = $region52
      $region51: #{tpu_custom_call.1} parent=5 // pred_region
        %s665 = ssub.s32 %s17, 2
        // Predicated region
        $region53: #{tpu_custom_call.1} parent=51 // pred_check
          %p666 = pneg %p156
        $region54: #{tpu_custom_call.1} parent=51 // pred_check_branch
          %668 = sbr.rel (%p666) target = $region56
        $region55: #{tpu_custom_call.1} parent=51 // pred_region
          %s669 = sand.u32 %s141, 1
          %s670 = scalar_lea.sflag [#allocation6], %s669
          %s671 = sand.u32 %s141, 1
          %s672 = smul.addr %s671, 8
          %s673 = scalar_lea.vmem [#allocation7], %s672
          %674 = dma.done %s670, 128
        $region56: #{tpu_custom_call.1} parent=51 // pred_fallthru
          _
      $region52: #{tpu_custom_call.1} parent=5 // pred_fallthru
        _
    $region6: #{tpu_custom_call.1} parent=1 // loop_footer
      %s21 = sadd.s32 1, %s17
    $region7: #{tpu_custom_call.1} parent=1 // loop_footer_branch
      %16 = sbr.rel target = $region3
    $region8: #{tpu_custom_call.1} parent=1 // loop_exit
      _
    %675 = vsyncpa [#allocation5], 1
    %s676 = scalar_lea.sflag [#allocation5], 1
    %677 = vsyncpa %s676, 1
    %678 = vsyncpa [#allocation6], 1
    %s679 = scalar_lea.sflag [#allocation6], 1
    %680 = vsyncpa %s679, 1

</llo_original>
